<compile_context>
chip_gen: v6e
topology: v6e:2x2x1
jax: 0.10.0
libtpu: 0.0.40
codegen_flags: <defaults>
</compile_context>

<pallas_src>
import functools

import jax
import jax.numpy as jnp
from jax.experimental import pallas as pl
from jax.experimental.pallas import tpu as pltpu


def _round_up(x, m):
    return ((x + m - 1) // m) * m


def _actor_kernel(x_ref, w1_ref, b1_ref, w2_ref, b2_ref, w3_ref, b3_ref, o_ref):
    """Fused 3-layer MLP on one batch tile: tanh(relu(relu(x@W1+b1)@W2+b2)@W3+b3).

    The ragged final batch tile computes relu/tanh on unspecified rows beyond B;
    this is safe because Pallas masks out-of-bounds output writes and TPU float
    ops do not trap.
    """
    # In-kernel cast of the f32 state tile to the weight compute dtype (no-op
    # for the f32 path); rides on the resident VMEM tile for free.
    x = x_ref[...].astype(w1_ref.dtype)

    # Layer 1: MXU matmul (f32 accumulate), bias add + relu on VPU.
    h1 = jnp.dot(x, w1_ref[...], preferred_element_type=jnp.float32) + b1_ref[...]
    h1 = jnp.maximum(h1, 0.0).astype(w2_ref.dtype)

    # Layer 2.
    h2 = jnp.dot(h1, w2_ref[...], preferred_element_type=jnp.float32) + b2_ref[...]
    h2 = jnp.maximum(h2, 0.0).astype(w3_ref.dtype)

    # Output layer: matmul on padded lanes, then slice to the true action width
    # before tanh (EUP) and the narrow (masked) store.  The slice stays within
    # the first (8,128) lane tile.
    h3 = jnp.dot(h2, w3_ref[...], preferred_element_type=jnp.float32) + b3_ref[...]
    a = o_ref.shape[-1]
    o_ref[...] = jnp.tanh(h3[:, :a]).astype(o_ref.dtype)


def prepare_actor_params(params, *, compute_dtype=jnp.bfloat16):
    """One-time prep outside the hot path: lane-pad to 128 and cast matmul weights.

    Zero padding is numerically inert: padded hidden units get zero weight and
    zero bias -> relu(0) = 0 -> contribute nothing downstream; padded output
    columns are never stored (kernel slices to action_size before the store).
    Biases stay f32 (added to f32 accumulators).
    """
    w1, b1 = params["w1"], params["b1"]
    w2, b2 = params["w2"], params["b2"]
    w3, b3 = params["w3"], params["b3"]

    S, H1 = w1.shape
    _, H2 = w2.shape
    _, A = w3.shape
    H1p = _round_up(max(H1, 128), 128)
    H2p = _round_up(max(H2, 128), 128)
    Ap = _round_up(max(A, 128), 128)

    def pad2(a, rows, cols):
        return jnp.pad(a, ((0, rows - a.shape[0]), (0, cols - a.shape[1])))

    prepared = {
        "w1": pad2(w1, S, H1p).astype(compute_dtype),
        "b1": pad2(b1, 1, H1p).astype(jnp.float32),
        "w2": pad2(w2, H1p, H2p).astype(compute_dtype),
        "b2": pad2(b2, 1, H2p).astype(jnp.float32),
        "w3": pad2(w3, H2p, Ap).astype(compute_dtype),
        "b3": pad2(b3, 1, Ap).astype(jnp.float32),
    }
    return prepared


@functools.partial(jax.jit, static_argnames=("action_size", "block_b"))
def actor_forward(state, params, *, action_size, block_b=2048):
    """Run the Actor forward pass with a single batch-tiled Pallas kernel.

    state:       [B, state_size] float32 (fed to the kernel as-is; cast happens
                 in-kernel so there is no extra XLA pass over HBM)
    params:      output of prepare_actor_params (lane-padded, possibly bf16)
    action_size: true (unpadded) action dimension
    block_b:     max batch tile rows
    returns      [B, action_size] float32 in (-1, 1)
    """
    w1, b1 = params["w1"], params["b1"]
    w2, b2 = params["w2"], params["b2"]
    w3, b3 = params["w3"], params["b3"]

    B, S = state.shape
    H1p = w1.shape[1]
    H2p = w2.shape[1]
    Ap = w3.shape[1]
    A = action_size

    # Batch tile: multiple of 8 sublanes; cap at ceil(B/2) so the grid has at
    # least 2 steps when B allows it (v7x megacore gets both TensorCores busy).
    half_b = _round_up((B + 1) // 2, 8)
    tb = _round_up(min(block_b, half_b), 8)
    grid = (pl.cdiv(B, tb),)

    # Advisory cost for XLA's scheduler (this is a tiny custom call).
    flops = 2 * B * (S * H1p + H1p * H2p + H2p * Ap)
    bytes_accessed = (
        B * S * state.dtype.itemsize
        + B * A * 4
        + sum(int(p.size) * p.dtype.itemsize for p in (w1, b1, w2, b2, w3, b3))
    )
    cost = pl.CostEstimate(
        flops=flops, transcendentals=B * A, bytes_accessed=bytes_accessed
    )

    # VMEM budget: f32 intermediates/temps + double-buffered x/out tiles +
    # resident weights.  Only raise the scoped limit if a big block_b needs it
    # (v7x: 32 MiB scoped default, 64 MiB physical).
    vmem_bytes = (
        6 * tb * max(H1p, H2p) * 4
        + 2 * tb * S * 4
        + 2 * tb * A * 4
        + 2 * (S * H1p + H1p * H2p + H2p * Ap) * w1.dtype.itemsize
    )
    cp_kwargs = dict(dimension_semantics=("parallel",))
    if vmem_bytes > 24 * 1024 * 1024:
        cp_kwargs["vmem_limit_bytes"] = min(vmem_bytes + (8 << 20), 56 << 20)

    out = pl.pallas_call(
        _actor_kernel,
        out_shape=jax.ShapeDtypeStruct((B, A), jnp.float32),
        grid=grid,
        in_specs=[
            # Activation tile marches over the batch; weights/biases pinned to
            # block 0 -> stay resident in VMEM across the whole grid.
            pl.BlockSpec((tb, S), lambda i: (i, 0)),
            pl.BlockSpec((S, H1p), lambda i: (0, 0)),
            pl.BlockSpec((1, H1p), lambda i: (0, 0)),
            pl.BlockSpec((H1p, H2p), lambda i: (0, 0)),
            pl.BlockSpec((1, H2p), lambda i: (0, 0)),
            pl.BlockSpec((H2p, Ap), lambda i: (0, 0)),
            pl.BlockSpec((1, Ap), lambda i: (0, 0)),
        ],
        # Narrow, un-padded output: full-extent last dim (action_size < 128 is
        # legal since it equals the array dim).  No post-call slice needed.
        out_specs=pl.BlockSpec((tb, A), lambda i: (i, 0)),
        compiler_params=pltpu.CompilerParams(**cp_kwargs),
        cost_estimate=cost,
    )(state, w1, b1, w2, b2, w3, b3)

    return out


def init_actor_params(key, state_size, action_size, layers=(64, 64)):
    """Deterministic init mirroring the PyTorch module's reset_parameters().

    Weights are stored transposed vs. PyTorch ([in_features, out_features]) so
    the kernel computes x @ W + b directly on the MXU.
    """
    k = jax.random.split(key, 6)
    h1, h2 = layers

    # hidden_init uses weight.size()[0] == out_features in PyTorch.
    lim1 = 1.0 / jnp.sqrt(jnp.float32(h1))
    lim2 = 1.0 / jnp.sqrt(jnp.float32(h2))

    w1 = jax.random.uniform(k[0], (state_size, h1), jnp.float32, -lim1, lim1)
    b1 = jax.random.uniform(k[1], (1, h1), jnp.float32, -lim1, lim1)
    w2 = jax.random.uniform(k[2], (h1, h2), jnp.float32, -lim2, lim2)
    b2 = jax.random.uniform(k[3], (1, h2), jnp.float32, -lim2, lim2)
    w3 = jax.random.uniform(k[4], (h2, action_size), jnp.float32, -0.003, 0.003)
    b3 = jax.random.uniform(k[5], (1, action_size), jnp.float32, -0.003, 0.003)

    return {"w1": w1, "b1": b1, "w2": w2, "b2": b2, "w3": w3, "b3": b3}


def _reference_forward(state, p):
    """Pure-JAX reference (unpadded f32 params) for correctness check."""
    x = jnp.maximum(state @ p["w1"] + p["b1"], 0.0)
    x = jnp.maximum(x @ p["w2"] + p["b2"], 0.0)
    return jnp.tanh(x @ p["w3"] + p["b3"])


# TODO(synk): batch_norm=True branch (nn.BatchNorm1d) not implemented; the
# reference module defaults to batch_norm=False which is the path kernelized.


if __name__ == "__main__":
    key = jax.random.PRNGKey(0)
    kp, kx1, kx2 = jax.random.split(key, 3)

    state_size, action_size = 8, 4
    raw_params = init_actor_params(kp, state_size, action_size, layers=(64, 64))

    # --- Small batch, f32 compute path (tight tolerance) ---------------------
    state = jax.random.normal(kx1, (2, state_size), jnp.float32)
    params_f32 = prepare_actor_params(raw_params, compute_dtype=jnp.float32)
    out = actor_forward(state, params_f32, action_size=action_size, block_b=2048)
    out = jax.block_until_ready(out)
    ref = _reference_forward(state, raw_params)
    assert out.shape == (2, action_size)
    assert jnp.allclose(out, ref, atol=1e-5, rtol=1e-5), "f32 mismatch vs reference"

    # --- Ragged batch, multi-tile, bf16 compute path (fast MXU on v6e/v7x) ---
    state2 = jax.random.normal(kx2, (37, state_size), jnp.float32)
    params_bf16 = prepare_actor_params(raw_params, compute_dtype=jnp.bfloat16)
    out2 = actor_forward(state2, params_bf16, action_size=action_size, block_b=16)
    out2 = jax.block_until_ready(out2)
    ref2 = _reference_forward(state2, raw_params)
    assert out2.shape == (37, action_size)
    assert jnp.allclose(out2, ref2, atol=2e-2, rtol=2e-2), "bf16 mismatch vs reference"

    # --- Larger batch, default tiling, checks >=2-step parallel grid path ----
    state3 = jax.random.normal(kx1, (4096, state_size), jnp.float32)
    out3 = actor_forward(state3, params_bf16, action_size=action_size)
    out3 = jax.block_until_ready(out3)
    ref3 = _reference_forward(state3, raw_params)
    assert out3.shape == (4096, action_size)
    assert jnp.allclose(out3, ref3, atol=2e-2, rtol=2e-2), "bf16 large-batch mismatch"

    print("KERNEL_OK")
</pallas_src>

<mosaic_0001>
module attributes {stable_mosaic.version = 11 : i64} {
  func.func @_actor_kernel(%arg0: i32, %arg1: memref<8x8xf32, #tpu.memory_space<vmem>>, %arg2: memref<8x128xf32, #tpu.memory_space<vmem>>, %arg3: memref<1x128xf32, #tpu.memory_space<vmem>>, %arg4: memref<128x128xf32, #tpu.memory_space<vmem>>, %arg5: memref<1x128xf32, #tpu.memory_space<vmem>>, %arg6: memref<128x128xf32, #tpu.memory_space<vmem>>, %arg7: memref<1x128xf32, #tpu.memory_space<vmem>>, %arg8: memref<8x4xf32, #tpu.memory_space<vmem>>) attributes {dimension_semantics = [#tpu.dimension_semantics<parallel>], iteration_bounds = array<i64: 1>, scalar_prefetch = 0 : i64, scratch_operands = 0 : i64, tpu.core_type = #tpu.core_type<tc>, window_params = [{transform_indices = @transform_0, window_bounds = array<i64: 8, 8>}, {pipeline_mode = #tpu.pipeline_mode<synchronous>, transform_indices = @transform_1, window_bounds = array<i64: 8, 128>}, {pipeline_mode = #tpu.pipeline_mode<synchronous>, transform_indices = @transform_2, window_bounds = array<i64: 1, 128>}, {pipeline_mode = #tpu.pipeline_mode<synchronous>, transform_indices = @transform_3, window_bounds = array<i64: 128, 128>}, {pipeline_mode = #tpu.pipeline_mode<synchronous>, transform_indices = @transform_4, window_bounds = array<i64: 1, 128>}, {pipeline_mode = #tpu.pipeline_mode<synchronous>, transform_indices = @transform_5, window_bounds = array<i64: 128, 128>}, {pipeline_mode = #tpu.pipeline_mode<synchronous>, transform_indices = @transform_6, window_bounds = array<i64: 1, 128>}, {transform_indices = @transform_7, window_bounds = array<i64: 8, 4>}]} {
    %c0 = arith.constant 0 : index
    %c0_0 = arith.constant 0 : index
    %0 = vector.load %arg1[%c0, %c0_0] : memref<8x8xf32, #tpu.memory_space<vmem>>, vector<8x8xf32>
    %c0_1 = arith.constant 0 : index
    %c0_2 = arith.constant 0 : index
    %1 = vector.load %arg2[%c0_1, %c0_2] : memref<8x128xf32, #tpu.memory_space<vmem>>, vector<8x128xf32>
    %cst = arith.constant dense<0.000000e+00> : vector<8x128xf32>
    %2 = tpu.matmul %0, %1, %cst {dimension_numbers = #tpu.dot_dimension_numbers<[1], [0], [0], [1], [0, 0, 1, 1], [], []>} : vector<8x8xf32>, vector<8x128xf32>, vector<8x128xf32> -> vector<8x128xf32>
    %c0_3 = arith.constant 0 : index
    %c0_4 = arith.constant 0 : index
    %3 = vector.load %arg3[%c0_3, %c0_4] : memref<1x128xf32, #tpu.memory_space<vmem>>, vector<1x128xf32>
    %4 = vector.broadcast %3 : vector<1x128xf32> to vector<8x128xf32>
    %5 = arith.addf %2, %4 : vector<8x128xf32>
    %cst_5 = arith.constant 0.000000e+00 : f32
    %6 = vector.broadcast %cst_5 : f32 to vector<8x128xf32>
    %7 = arith.maximumf %5, %6 : vector<8x128xf32>
    %c0_6 = arith.constant 0 : index
    %c0_7 = arith.constant 0 : index
    %8 = vector.load %arg4[%c0_6, %c0_7] : memref<128x128xf32, #tpu.memory_space<vmem>>, vector<128x128xf32>
    %cst_8 = arith.constant dense<0.000000e+00> : vector<8x128xf32>
    %9 = tpu.matmul %7, %8, %cst_8 {dimension_numbers = #tpu.dot_dimension_numbers<[1], [0], [0], [1], [0, 0, 1, 1], [], []>} : vector<8x128xf32>, vector<128x128xf32>, vector<8x128xf32> -> vector<8x128xf32>
    %c0_9 = arith.constant 0 : index
    %c0_10 = arith.constant 0 : index
    %10 = vector.load %arg5[%c0_9, %c0_10] : memref<1x128xf32, #tpu.memory_space<vmem>>, vector<1x128xf32>
    %11 = vector.broadcast %10 : vector<1x128xf32> to vector<8x128xf32>
    %12 = arith.addf %9, %11 : vector<8x128xf32>
    %cst_11 = arith.constant 0.000000e+00 : f32
    %13 = vector.broadcast %cst_11 : f32 to vector<8x128xf32>
    %14 = arith.maximumf %12, %13 : vector<8x128xf32>
    %c0_12 = arith.constant 0 : index
    %c0_13 = arith.constant 0 : index
    %15 = vector.load %arg6[%c0_12, %c0_13] : memref<128x128xf32, #tpu.memory_space<vmem>>, vector<128x128xf32>
    %cst_14 = arith.constant dense<0.000000e+00> : vector<8x128xf32>
    %16 = tpu.matmul %14, %15, %cst_14 {dimension_numbers = #tpu.dot_dimension_numbers<[1], [0], [0], [1], [0, 0, 1, 1], [], []>} : vector<8x128xf32>, vector<128x128xf32>, vector<8x128xf32> -> vector<8x128xf32>
    %c0_15 = arith.constant 0 : index
    %c0_16 = arith.constant 0 : index
    %17 = vector.load %arg7[%c0_15, %c0_16] : memref<1x128xf32, #tpu.memory_space<vmem>>, vector<1x128xf32>
    %18 = vector.broadcast %17 : vector<1x128xf32> to vector<8x128xf32>
    %19 = arith.addf %16, %18 : vector<8x128xf32>
    %20 = vector.extract_strided_slice %19 {offsets = [0, 0], sizes = [8, 4], strides = [1, 1]} : vector<8x128xf32> to vector<8x4xf32>
    %21 = math.tanh %20 : vector<8x4xf32>
    %c0_17 = arith.constant 0 : index
    %c0_18 = arith.constant 0 : index
    %22 = vector.load %arg8[%c0_17, %c0_18] : memref<8x4xf32, #tpu.memory_space<vmem>>, vector<8x4xf32>
    tpu.vector_store %arg8[%c0_17, %c0_18], %21 {strides = array<i32>} : memref<8x4xf32, #tpu.memory_space<vmem>>, vector<8x4xf32>,
    return
  }
  func.func @transform_0(%arg0: i32) -> (i32, i32) {
    %c0_i32 = arith.constant 0 : i32
    %c0_i32_0 = arith.constant 0 : i32
    return %arg0, %c0_i32 : i32, i32
  }
  func.func @transform_1(%arg0: i32) -> (i32, i32) {
    %c0_i32 = arith.constant 0 : i32
    %c0_i32_0 = arith.constant 0 : i32
    %c0_i32_1 = arith.constant 0 : i32
    return %c0_i32, %c0_i32_0 : i32, i32
  }
  func.func @transform_2(%arg0: i32) -> (i32, i32) {
    %c0_i32 = arith.constant 0 : i32
    %c0_i32_0 = arith.constant 0 : i32
    %c0_i32_1 = arith.constant 0 : i32
    return %c0_i32, %c0_i32_0 : i32, i32
  }
  func.func @transform_3(%arg0: i32) -> (i32, i32) {
    %c0_i32 = arith.constant 0 : i32
    %c0_i32_0 = arith.constant 0 : i32
    %c0_i32_1 = arith.constant 0 : i32
    return %c0_i32, %c0_i32_0 : i32, i32
  }
  func.func @transform_4(%arg0: i32) -> (i32, i32) {
    %c0_i32 = arith.constant 0 : i32
    %c0_i32_0 = arith.constant 0 : i32
    %c0_i32_1 = arith.constant 0 : i32
    return %c0_i32, %c0_i32_0 : i32, i32
  }
  func.func @transform_5(%arg0: i32) -> (i32, i32) {
    %c0_i32 = arith.constant 0 : i32
    %c0_i32_0 = arith.constant 0 : i32
    %c0_i32_1 = arith.constant 0 : i32
    return %c0_i32, %c0_i32_0 : i32, i32
  }
  func.func @transform_6(%arg0: i32) -> (i32, i32) {
    %c0_i32 = arith.constant 0 : i32
    %c0_i32_0 = arith.constant 0 : i32
    %c0_i32_1 = arith.constant 0 : i32
    return %c0_i32, %c0_i32_0 : i32, i32
  }
  func.func @transform_7(%arg0: i32) -> (i32, i32) {
    %c0_i32 = arith.constant 0 : i32
    %c0_i32_0 = arith.constant 0 : i32
    return %arg0, %c0_i32 : i32, i32
  }
}

</mosaic_0001>

<llo_original>
// kernel: actor_forward.1
$region0: #{actor_forward.1}
  #allocation0 [shape = 'u32[]', space=smem, size = 0x4, offset = 0x4, fixed_abs, tag = 'smem constant byte address 0x4 - core index']
  #allocation1 [shape = 'u32[144,128]{1,0:T(1,128)}', space=vmem, size = 0x12000, scoped, tag = 'internal scratch']
  %s0 = inlined_call_operand.hbm [shape: f32[2,8], index: 0, kind: input, shape index: {}]
  %s1 = inlined_call_operand.hbm [shape: f32[8,128], index: 1, kind: input, shape index: {}]
  %s2 = inlined_call_operand.vmem [shape: f32[1,128], index: 2, kind: input, shape index: {}]
  %s3 = inlined_call_operand.hbm [shape: f32[128,128], index: 3, kind: input, shape index: {}]
  %s4 = inlined_call_operand.vmem [shape: f32[1,128], index: 4, kind: input, shape index: {}]
  %s5 = inlined_call_operand.hbm [shape: f32[128,128], index: 5, kind: input, shape index: {}]
  %s6 = inlined_call_operand.vmem [shape: f32[1,128], index: 6, kind: input, shape index: {}]
  %s7 = inlined_call_operand.hbm [shape: f32[2,4], index: 7, kind: output, shape index: {}]
  %s8 = sld [smem:[#allocation0]]
  $region54: #{actor_forward.1} parent=0
    _
  %s10 = ssub.s32 1, %s8
  %s11 = scalar_select 0, %s10, %s8
  $region1: #{actor_forward.1} parent=0
    #allocation2 [shape = 'u8[4096]{0}', space=vmem, size = 0x1000, scoped, tag = 'input window, operand 0, single buffered']
    #allocation3 [shape = 's32[1]{0}', space=sflag, size = 0x4, scoped, tag = 'scoped memory for actor_forward.1']
    #allocation4 [shape = 's32[1]{0}', space=sflag, size = 0x4, scoped, tag = 'scoped memory for actor_forward.1']
    #allocation5 [shape = 'u8[4096]{0}', space=vmem, size = 0x1000, scoped, tag = 'input window, operand 1, single buffered']
    #allocation6 [shape = 's32[1]{0}', space=sflag, size = 0x4, scoped, tag = 'scoped memory for actor_forward.1']
    #allocation7 [shape = 'u8[65536]{0}', space=vmem, size = 0x10000, scoped, tag = 'input window, operand 3, single buffered']
    #allocation8 [shape = 'u8[65536]{0}', space=vmem, size = 0x10000, scoped, tag = 'input window, operand 5, single buffered']
    #allocation9 [shape = 's32[1]{0}', space=sflag, size = 0x4, scoped, tag = 'scoped memory for actor_forward.1']
    #allocation10 [shape = 'u8[4096]{0}', space=vmem, size = 0x1000, scoped, tag = 'output window, operand 0, single buffered']
    %12 = vsyncpa [#allocation3], 0
    %13 = vsyncpa [#allocation6], 0
    %14 = vsyncpa [#allocation9], 0
    %15 = vsyncpa [#allocation4], 0
    // Predicated region
    $region2: #{actor_forward.1} parent=1 // pred_check
      _
    $region3: #{actor_forward.1} parent=1 // pred_check_branch
      %17 = sbr.rel (0) target = $region5
    $region4: #{actor_forward.1} parent=1 // pred_region
      %s19 = ssub.s32 128, 32
      %20 = vsyncadd [#allocation3], %s19
      %s21 = sshll.u32 [#allocation2], 4
      %s22 = int_to_ptr.vmem [resolvable:$true] %s21
      %27 = dma.hbm_to_vmem [thread:$0]  %s0, 32, %s22, [#allocation3], 32, 32, 2
    $region5: #{actor_forward.1} parent=1 // pred_fallthru
      _
    // Predicated region
    $region6: #{actor_forward.1} parent=1 // pred_check
      _
    $region7: #{actor_forward.1} parent=1 // pred_check_branch
      %29 = sbr.rel (0) target = $region9
    $region8: #{actor_forward.1} parent=1 // pred_region
      %s31 = ssub.s32 128, 128
      %32 = vsyncadd [#allocation6], %s31
      %s34 = sshll.u32 [#allocation5], 4
      %s35 = int_to_ptr.vmem [resolvable:$true] %s34
      %37 = dma.hbm_to_vmem [thread:$0]  %s1, 128, %s35, [#allocation6]
    $region9: #{actor_forward.1} parent=1 // pred_fallthru
      _
    // Predicated region
    $region10: #{actor_forward.1} parent=1 // pred_check
      _
    $region11: #{actor_forward.1} parent=1 // pred_check_branch
      %39 = sbr.rel (0) target = $region13
    $region12: #{actor_forward.1} parent=1 // pred_region
      _
    $region13: #{actor_forward.1} parent=1 // pred_fallthru
      _
    // Predicated region
    $region14: #{actor_forward.1} parent=1 // pred_check
      _
    $region15: #{actor_forward.1} parent=1 // pred_check_branch
      %41 = sbr.rel (0) target = $region17
    $region16: #{actor_forward.1} parent=1 // pred_region
      %s43 = ssub.s32 2048, 2048
      %44 = vsyncadd [#allocation6], %s43
      %s45 = sshll.u32 [#allocation7], 4
      %s46 = int_to_ptr.vmem [resolvable:$true] %s45
      %51 = dma.hbm_to_vmem [thread:$0]  %s3, 2048, %s46, [#allocation6], 128, 128, 8
    $region17: #{actor_forward.1} parent=1 // pred_fallthru
      _
    // Predicated region
    $region18: #{actor_forward.1} parent=1 // pred_check
      _
    $region19: #{actor_forward.1} parent=1 // pred_check_branch
      %53 = sbr.rel (0) target = $region21
    $region20: #{actor_forward.1} parent=1 // pred_region
      _
    $region21: #{actor_forward.1} parent=1 // pred_fallthru
      _
    // Predicated region
    $region22: #{actor_forward.1} parent=1 // pred_check
      _
    $region23: #{actor_forward.1} parent=1 // pred_check_branch
      %55 = sbr.rel (0) target = $region25
    $region24: #{actor_forward.1} parent=1 // pred_region
      %s57 = ssub.s32 2048, 2048
      %58 = vsyncadd [#allocation9], %s57
      %s59 = sshll.u32 [#allocation8], 4
      %s60 = int_to_ptr.vmem [resolvable:$true] %s59
      %65 = dma.hbm_to_vmem [thread:$0]  %s5, 2048, %s60, [#allocation9], 128, 128, 8
    $region25: #{actor_forward.1} parent=1 // pred_fallthru
      _
    // Predicated region
    $region26: #{actor_forward.1} parent=1 // pred_check
      _
    $region27: #{actor_forward.1} parent=1 // pred_check_branch
      %67 = sbr.rel (0) target = $region29
    $region28: #{actor_forward.1} parent=1 // pred_region
      _
    $region29: #{actor_forward.1} parent=1 // pred_fallthru
      _
    // Predicated region
    $region30: #{actor_forward.1} parent=1 // pred_check
      _
    $region31: #{actor_forward.1} parent=1 // pred_check_branch
      %69 = sbr.rel (0) target = $region33
    $region32: #{actor_forward.1} parent=1 // pred_region
      %70 = dma.done [#allocation3], 128
    $region33: #{actor_forward.1} parent=1 // pred_fallthru
      _
    // Predicated region
    $region34: #{actor_forward.1} parent=1 // pred_check
      _
    $region35: #{actor_forward.1} parent=1 // pred_check_branch
      %72 = sbr.rel (0) target = $region37
    $region36: #{actor_forward.1} parent=1 // pred_region
      %73 = dma.done [#allocation6], 128
    $region37: #{actor_forward.1} parent=1 // pred_fallthru
      _
    // Predicated region
    $region38: #{actor_forward.1} parent=1 // pred_check
      _
    $region39: #{actor_forward.1} parent=1 // pred_check_branch
      %75 = sbr.rel (0) target = $region41
    $region40: #{actor_forward.1} parent=1 // pred_region
      %76 = dma.done [#allocation6], 2048
    $region41: #{actor_forward.1} parent=1 // pred_fallthru
      _
    // Predicated region
    $region42: #{actor_forward.1} parent=1 // pred_check
      _
    $region43: #{actor_forward.1} parent=1 // pred_check_branch
      %78 = sbr.rel (0) target = $region45
    $region44: #{actor_forward.1} parent=1 // pred_region
      %79 = dma.done [#allocation9], 2048
    $region45: #{actor_forward.1} parent=1 // pred_fallthru
      _
    %v80 = vld [vmem:[#allocation2] sm:$0xff]
    %v81 = vld [vmem:[#allocation5] sm:$0xff]
    %v82 = vld [vmem:[%s2] sm:$0x1]
    %v84 = vlaneseq
    %v85 = vshrl.u32 %v84, 7
    %v86 = vsub.s32 0, %v85
    %v87 = vrot.slane %v82, %v86
    %vm89 = vcmask 64512
    %v91 = vsel %vm89, %v80, 0
    %93 = vmatprep.subr.mxu0 0.0
    %94 = vmatpush1.msra.mxu0 0.0
    %95 = vmatprep.subr.mxu0 0.0
    %96 = vmatpush1.msra.mxu0 0.0
    %97 = vmatprep.subr.mxu0 0.0
    %98 = vmatpush1.msra.mxu0 0.0
    %99 = vmatprep.subr.mxu0 0.0
    %100 = vmatpush1.msra.mxu0 0.0
    %101 = vmatprep.subr.mxu0 0.0
    %102 = vmatpush1.msra.mxu0 0.0
    %103 = vmatprep.subr.mxu0 0.0
    %104 = vmatpush1.msra.mxu0 0.0
    %105 = vmatprep.subr.mxu0 0.0
    %106 = vmatpush1.msra.mxu0 0.0
    %107 = vmatprep.subr.mxu0 0.0
    %108 = vmatpush1.msra.mxu0 0.0
    %109 = vmatprep.subr.mxu0 0.0
    %110 = vmatpush1.msra.mxu0 0.0
    %111 = vmatprep.subr.mxu0 0.0
    %112 = vmatpush1.msra.mxu0 0.0
    %113 = vmatprep.subr.mxu0 0.0
    %114 = vmatpush1.msra.mxu0 0.0
    %115 = vmatprep.subr.mxu0 0.0
    %116 = vmatpush1.msra.mxu0 0.0
    %117 = vmatprep.subr.mxu0 0.0
    %118 = vmatpush1.msra.mxu0 0.0
    %119 = vmatprep.subr.mxu0 0.0
    %120 = vmatpush1.msra.mxu0 0.0
    %121 = vmatprep.subr.mxu0 0.0
    %122 = vmatpush1.msra.mxu0 0.0
    %123 = vmatprep.subr.mxu0 0.0
    %124 = vmatpush1.msra.mxu0 %v81
    %125 = vmatprep.subr.mxu0 0.0
    %126 = vmatpush2.msra.mxu0 0.0
    %127 = vmatprep.subr.mxu0 0.0
    %128 = vmatpush2.msra.mxu0 0.0
    %129 = vmatprep.subr.mxu0 0.0
    %130 = vmatpush2.msra.mxu0 0.0
    %131 = vmatprep.subr.mxu0 0.0
    %132 = vmatpush2.msra.mxu0 0.0
    %133 = vmatprep.subr.mxu0 0.0
    %134 = vmatpush2.msra.mxu0 0.0
    %135 = vmatprep.subr.mxu0 0.0
    %136 = vmatpush2.msra.mxu0 0.0
    %137 = vmatprep.subr.mxu0 0.0
    %138 = vmatpush2.msra.mxu0 0.0
    %139 = vmatprep.subr.mxu0 0.0
    %140 = vmatpush2.msra.mxu0 0.0
    %141 = vmatprep.subr.mxu0 0.0
    %142 = vmatpush2.msra.mxu0 0.0
    %143 = vmatprep.subr.mxu0 0.0
    %144 = vmatpush2.msra.mxu0 0.0
    %145 = vmatprep.subr.mxu0 0.0
    %146 = vmatpush2.msra.mxu0 0.0
    %147 = vmatprep.subr.mxu0 0.0
    %148 = vmatpush2.msra.mxu0 0.0
    %149 = vmatprep.subr.mxu0 0.0
    %150 = vmatpush2.msra.mxu0 0.0
    %151 = vmatprep.subr.mxu0 0.0
    %152 = vmatpush2.msra.mxu0 0.0
    %153 = vmatprep.subr.mxu0 0.0
    %154 = vmatpush2.msra.mxu0 0.0
    %155 = vmatprep.subr.mxu0 0.0
    %156 = vmatpush2.msra.mxu0 0.0
    %157 = vmatprep.mubr.f32.mxu0 0.0
    %158 = vmatmul.mubr.f32.gmra.mxu0 %v91
    %v159 = vpop.f32.mrf.mxu0
    %v160 = vadd.f32 %v87, %v159
    %v161 = vpop.f32.mrf.mxu0
    %162 = vdwg.mxu0
    %v163 = vmax.f32 %v160, 0.0
    %v164 = vld [vmem:[#allocation7] sm:$0xff]
    %v165 = vld [vmem:[#allocation7 + $0x8] sm:$0xff]
    %v166 = vld [vmem:[#allocation7 + $0x10] sm:$0xff]
    %v167 = vld [vmem:[#allocation7 + $0x18] sm:$0xff]
    %v168 = vld [vmem:[#allocation7 + $0x20] sm:$0xff]
    %v169 = vld [vmem:[#allocation7 + $0x28] sm:$0xff]
    %v170 = vld [vmem:[#allocation7 + $0x30] sm:$0xff]
    %v171 = vld [vmem:[#allocation7 + $0x38] sm:$0xff]
    %v172 = vld [vmem:[#allocation7 + $0x40] sm:$0xff]
    %v173 = vld [vmem:[#allocation7 + $0x48] sm:$0xff]
    %v174 = vld [vmem:[#allocation7 + $0x50] sm:$0xff]
    %v175 = vld [vmem:[#allocation7 + $0x58] sm:$0xff]
    %v176 = vld [vmem:[#allocation7 + $0x60] sm:$0xff]
    %v177 = vld [vmem:[#allocation7 + $0x68] sm:$0xff]
    %v178 = vld [vmem:[#allocation7 + $0x70] sm:$0xff]
    %v179 = vld [vmem:[#allocation7 + $0x78] sm:$0xff]
    %v180 = vld [vmem:[%s4] sm:$0x1]
    %v182 = vlaneseq
    %v183 = vshrl.u32 %v182, 7
    %v184 = vsub.s32 0, %v183
    %v185 = vrot.slane %v180, %v184
    %187 = vmatprep.subr.mxu0 0.0
    %188 = vmatpush1.msra.mxu0 %v179
    %189 = vmatprep.subr.mxu0 0.0
    %190 = vmatpush1.msra.mxu0 %v178
    %191 = vmatprep.subr.mxu0 0.0
    %192 = vmatpush1.msra.mxu0 %v177
    %193 = vmatprep.subr.mxu0 0.0
    %194 = vmatpush1.msra.mxu0 %v176
    %195 = vmatprep.subr.mxu0 0.0
    %196 = vmatpush1.msra.mxu0 %v175
    %197 = vmatprep.subr.mxu0 0.0
    %198 = vmatpush1.msra.mxu0 %v174
    %199 = vmatprep.subr.mxu0 0.0
    %200 = vmatpush1.msra.mxu0 %v173
    %201 = vmatprep.subr.mxu0 0.0
    %202 = vmatpush1.msra.mxu0 %v172
    %203 = vmatprep.subr.mxu0 0.0
    %204 = vmatpush1.msra.mxu0 %v171
    %205 = vmatprep.subr.mxu0 0.0
    %206 = vmatpush1.msra.mxu0 %v170
    %207 = vmatprep.subr.mxu0 0.0
    %208 = vmatpush1.msra.mxu0 %v169
    %209 = vmatprep.subr.mxu0 0.0
    %210 = vmatpush1.msra.mxu0 %v168
    %211 = vmatprep.subr.mxu0 0.0
    %212 = vmatpush1.msra.mxu0 %v167
    %213 = vmatprep.subr.mxu0 0.0
    %214 = vmatpush1.msra.mxu0 %v166
    %215 = vmatprep.subr.mxu0 0.0
    %216 = vmatpush1.msra.mxu0 %v165
    %217 = vmatprep.subr.mxu0 0.0
    %218 = vmatpush1.msra.mxu0 %v164
    %219 = vmatprep.subr.mxu0 0.0
    %220 = vmatpush2.msra.mxu0 0.0
    %221 = vmatprep.subr.mxu0 0.0
    %222 = vmatpush2.msra.mxu0 0.0
    %223 = vmatprep.subr.mxu0 0.0
    %224 = vmatpush2.msra.mxu0 0.0
    %225 = vmatprep.subr.mxu0 0.0
    %226 = vmatpush2.msra.mxu0 0.0
    %227 = vmatprep.subr.mxu0 0.0
    %228 = vmatpush2.msra.mxu0 0.0
    %229 = vmatprep.subr.mxu0 0.0
    %230 = vmatpush2.msra.mxu0 0.0
    %231 = vmatprep.subr.mxu0 0.0
    %232 = vmatpush2.msra.mxu0 0.0
    %233 = vmatprep.subr.mxu0 0.0
    %234 = vmatpush2.msra.mxu0 0.0
    %235 = vmatprep.subr.mxu0 0.0
    %236 = vmatpush2.msra.mxu0 0.0
    %237 = vmatprep.subr.mxu0 0.0
    %238 = vmatpush2.msra.mxu0 0.0
    %239 = vmatprep.subr.mxu0 0.0
    %240 = vmatpush2.msra.mxu0 0.0
    %241 = vmatprep.subr.mxu0 0.0
    %242 = vmatpush2.msra.mxu0 0.0
    %243 = vmatprep.subr.mxu0 0.0
    %244 = vmatpush2.msra.mxu0 0.0
    %245 = vmatprep.subr.mxu0 0.0
    %246 = vmatpush2.msra.mxu0 0.0
    %247 = vmatprep.subr.mxu0 0.0
    %248 = vmatpush2.msra.mxu0 0.0
    %249 = vmatprep.subr.mxu0 0.0
    %250 = vmatpush2.msra.mxu0 0.0
    %251 = vmatprep.mubr.f32.mxu0 0.0
    %252 = vmatmul.mubr.f32.gmra.mxu0 %v163
    %v253 = vpop.f32.mrf.mxu0
    %v254 = vadd.f32 %v185, %v253
    %v255 = vpop.f32.mrf.mxu0
    %256 = vdwg.mxu0
    %v257 = vmax.f32 %v254, 0.0
    %v258 = vld [vmem:[#allocation8] sm:$0xff]
    %v259 = vld [vmem:[#allocation8 + $0x8] sm:$0xff]
    %v260 = vld [vmem:[#allocation8 + $0x10] sm:$0xff]
    %v261 = vld [vmem:[#allocation8 + $0x18] sm:$0xff]
    %v262 = vld [vmem:[#allocation8 + $0x20] sm:$0xff]
    %v263 = vld [vmem:[#allocation8 + $0x28] sm:$0xff]
    %v264 = vld [vmem:[#allocation8 + $0x30] sm:$0xff]
    %v265 = vld [vmem:[#allocation8 + $0x38] sm:$0xff]
    %v266 = vld [vmem:[#allocation8 + $0x40] sm:$0xff]
    %v267 = vld [vmem:[#allocation8 + $0x48] sm:$0xff]
    %v268 = vld [vmem:[#allocation8 + $0x50] sm:$0xff]
    %v269 = vld [vmem:[#allocation8 + $0x58] sm:$0xff]
    %v270 = vld [vmem:[#allocation8 + $0x60] sm:$0xff]
    %v271 = vld [vmem:[#allocation8 + $0x68] sm:$0xff]
    %v272 = vld [vmem:[#allocation8 + $0x70] sm:$0xff]
    %v273 = vld [vmem:[#allocation8 + $0x78] sm:$0xff]
    %v274 = vld [vmem:[%s6] sm:$0x1]
    %v276 = vlaneseq
    %v277 = vshrl.u32 %v276, 7
    %v278 = vsub.s32 0, %v277
    %v279 = vrot.slane %v274, %v278
    %281 = vmatprep.subr.mxu0 0.0
    %282 = vmatpush1.msra.mxu0 %v273
    %283 = vmatprep.subr.mxu0 0.0
    %284 = vmatpush1.msra.mxu0 %v272
    %285 = vmatprep.subr.mxu0 0.0
    %286 = vmatpush1.msra.mxu0 %v271
    %287 = vmatprep.subr.mxu0 0.0
    %288 = vmatpush1.msra.mxu0 %v270
    %289 = vmatprep.subr.mxu0 0.0
    %290 = vmatpush1.msra.mxu0 %v269
    %291 = vmatprep.subr.mxu0 0.0
    %292 = vmatpush1.msra.mxu0 %v268
    %293 = vmatprep.subr.mxu0 0.0
    %294 = vmatpush1.msra.mxu0 %v267
    %295 = vmatprep.subr.mxu0 0.0
    %296 = vmatpush1.msra.mxu0 %v266
    %297 = vmatprep.subr.mxu0 0.0
    %298 = vmatpush1.msra.mxu0 %v265
    %299 = vmatprep.subr.mxu0 0.0
    %300 = vmatpush1.msra.mxu0 %v264
    %301 = vmatprep.subr.mxu0 0.0
    %302 = vmatpush1.msra.mxu0 %v263
    %303 = vmatprep.subr.mxu0 0.0
    %304 = vmatpush1.msra.mxu0 %v262
    %305 = vmatprep.subr.mxu0 0.0
    %306 = vmatpush1.msra.mxu0 %v261
    %307 = vmatprep.subr.mxu0 0.0
    %308 = vmatpush1.msra.mxu0 %v260
    %309 = vmatprep.subr.mxu0 0.0
    %310 = vmatpush1.msra.mxu0 %v259
    %311 = vmatprep.subr.mxu0 0.0
    %312 = vmatpush1.msra.mxu0 %v258
    %313 = vmatprep.subr.mxu0 0.0
    %314 = vmatpush2.msra.mxu0 0.0
    %315 = vmatprep.subr.mxu0 0.0
    %316 = vmatpush2.msra.mxu0 0.0
    %317 = vmatprep.subr.mxu0 0.0
    %318 = vmatpush2.msra.mxu0 0.0
    %319 = vmatprep.subr.mxu0 0.0
    %320 = vmatpush2.msra.mxu0 0.0
    %321 = vmatprep.subr.mxu0 0.0
    %322 = vmatpush2.msra.mxu0 0.0
    %323 = vmatprep.subr.mxu0 0.0
    %324 = vmatpush2.msra.mxu0 0.0
    %325 = vmatprep.subr.mxu0 0.0
    %326 = vmatpush2.msra.mxu0 0.0
    %327 = vmatprep.subr.mxu0 0.0
    %328 = vmatpush2.msra.mxu0 0.0
    %329 = vmatprep.subr.mxu0 0.0
    %330 = vmatpush2.msra.mxu0 0.0
    %331 = vmatprep.subr.mxu0 0.0
    %332 = vmatpush2.msra.mxu0 0.0
    %333 = vmatprep.subr.mxu0 0.0
    %334 = vmatpush2.msra.mxu0 0.0
    %335 = vmatprep.subr.mxu0 0.0
    %336 = vmatpush2.msra.mxu0 0.0
    %337 = vmatprep.subr.mxu0 0.0
    %338 = vmatpush2.msra.mxu0 0.0
    %339 = vmatprep.subr.mxu0 0.0
    %340 = vmatpush2.msra.mxu0 0.0
    %341 = vmatprep.subr.mxu0 0.0
    %342 = vmatpush2.msra.mxu0 0.0
    %343 = vmatprep.subr.mxu0 0.0
    %344 = vmatpush2.msra.mxu0 0.0
    %345 = vmatprep.mubr.f32.mxu0 0.0
    %346 = vmatmul.mubr.f32.gmra.mxu0 %v257
    %v347 = vpop.f32.mrf.mxu0
    %v348 = vadd.f32 %v279, %v347
    %v349 = vpop.f32.mrf.mxu0
    %350 = vdwg.mxu0
    %v351 = vtanh.pop %v348
    %vm352 = vcmask 31744
    %353 = vst.msk [vmem:[#allocation10] sm:$0xff] %vm352, %v351
    // Predicated region
    $region46: #{actor_forward.1} parent=1 // pred_check
      _
    $region47: #{actor_forward.1} parent=1 // pred_check_branch
      %355 = sbr.rel (0) target = $region49
    $region48: #{actor_forward.1} parent=1 // pred_region
      %s357 = ssub.s32 128, 32
      %358 = vsyncadd [#allocation4], %s357
      %s359 = sshll.u32 [#allocation10], 4
      %s360 = int_to_ptr.vmem [resolvable:$true] %s359
      %365 = dma.vmem_to_hbm [thread:$0]  %s360, 32, %s7, [#allocation4], 32, 32, 2
    $region49: #{actor_forward.1} parent=1 // pred_fallthru
      _
    // Predicated region
    $region50: #{actor_forward.1} parent=1 // pred_check
      _
    $region51: #{actor_forward.1} parent=1 // pred_check_branch
      %367 = sbr.rel (0) target = $region53
    $region52: #{actor_forward.1} parent=1 // pred_region
      %368 = dma.done [#allocation4], 128
    $region53: #{actor_forward.1} parent=1 // pred_fallthru
      _
    %369 = vsyncpa [#allocation3], 1
    %370 = vsyncpa [#allocation6], 1
    %371 = vsyncpa [#allocation9], 1
    %372 = vsyncpa [#allocation4], 1

</llo_original>
